<compile_context>
chip_gen: v5e
topology: v5e:2x2
jax: 0.10.0
libtpu: 0.0.40
codegen_flags: <defaults>
</compile_context>

<pallas_src>
import functools

import jax
import jax.numpy as jnp
from jax.experimental import pallas as pl
from jax.experimental.pallas import tpu as pltpu

_LANE = 128
_SUBLANE = 8
_WEIGHT_KEYS = ("w1", "b1", "w2", "b2", "w3", "b3", "wd", "bd")

# Lazily-resolved: does this JAX build accept pl.Buffered on pallas_call specs?
_SINGLE_BUFFER_STATE = {"ok": None}


def _round_up(x, m):
    return (x + m - 1) // m * m


def _cdiv(a, b):
    return -(-a // b)


def _pad2d(a, rows, cols):
    r, c = a.shape
    if r == rows and c == cols:
        return a
    return jnp.pad(a, ((0, rows - r), (0, cols - c)))


def _vmem_capacity_bytes():
    try:
        return int(pltpu.get_tpu_info().vmem_capacity_bytes)
    except Exception:
        return 128 << 20  # v5e / v6e physical VMEM


def prepare_params(params, matmul_dtype=jnp.float32):
    """One-time weight padding / casting (hoisted out of the forward pass).

    Hidden dims are zero-padded to multiples of 128 (lane-dense MXU ops);
    n_in is only rounded to a multiple of 8 (usually a no-op) so x / decoded
    can be passed unpadded.  Padded rows/cols are zero -> results unchanged.
    """
    matmul_dtype = jnp.dtype(matmul_dtype)
    n_in = params["w1"].shape[0]
    n_half = params["w1"].shape[1]
    n_hidden = params["w3"].shape[1]
    n_in_p = _round_up(n_in, _SUBLANE)
    n_half_p = _round_up(n_half, _LANE)
    n_hidden_p = _round_up(n_hidden, _LANE)

    cast = lambda w: w.astype(matmul_dtype)
    prep = {
        "_prepared": True,
        "n_in": n_in, "n_half": n_half, "n_hidden": n_hidden,
        "n_in_p": n_in_p, "n_half_p": n_half_p, "n_hidden_p": n_hidden_p,
        "matmul_dtype": matmul_dtype,
        "w1": cast(_pad2d(params["w1"], n_in_p, n_half_p)),
        "b1": _pad2d(params["b1"], 1, n_half_p).astype(jnp.float32),
        "w2": cast(_pad2d(params["w2"], n_half_p, n_half_p)),
        "b2": _pad2d(params["b2"], 1, n_half_p).astype(jnp.float32),
        "w3": cast(_pad2d(params["w3"], n_half_p, n_hidden_p)),
        "b3": _pad2d(params["b3"], 1, n_hidden_p).astype(jnp.float32),
        "wd": cast(_pad2d(params["wd"], n_hidden_p, n_in_p)),
        "bd": _pad2d(params["bd"], 1, n_in_p).astype(jnp.float32),
    }
    prep["weight_bytes"] = int(sum(int(prep[k].size) * prep[k].dtype.itemsize
                                   for k in _WEIGHT_KEYS))
    return prep


def _ae_tile_kernel(x_ref, w1_ref, b1_ref, w2_ref, b2_ref, w3_ref, b3_ref,
                    wd_ref, bd_ref, out_ref, hsum_ref,
                    *, block_b, batch_size, matmul_dtype, need_mask):
    """One batch tile: 3-layer sigmoid encoder, linear decoder, and a partial
    sum of hidden activations (mean + KL are finished in the wrapper)."""
    cast_operands = jnp.dtype(matmul_dtype) != jnp.dtype(jnp.float32)

    def dense(a, w_ref, b_ref):
        if cast_operands:
            a = a.astype(matmul_dtype)
        return jnp.dot(a, w_ref[...],
                       preferred_element_type=jnp.float32) + b_ref[...]

    x = x_ref[...]
    h1 = jax.nn.sigmoid(dense(x, w1_ref, b1_ref))
    h2 = jax.nn.sigmoid(dense(h1, w2_ref, b2_ref))
    hidden = jax.nn.sigmoid(dense(h2, w3_ref, b3_ref))

    out_ref[...] = dense(hidden, wd_ref, bd_ref)          # decoder

    if need_mask:  # static: only emitted when the batch was padded
        row = (jax.lax.broadcasted_iota(jnp.int32, (block_b, 1), 0)
               + pl.program_id(0) * block_b)
        hidden = hidden * (row < batch_size).astype(jnp.float32)
    hsum_ref[...] = jnp.sum(hidden, axis=0, keepdims=True).reshape(
        1, 1, hidden.shape[-1])


def _vmem_need_bytes(block_b, n_in_p, n_half_p, n_hidden_p, weight_bytes,
                     weight_buffers):
    f32 = 4
    io_tiles = 2 * 2 * block_b * n_in_p * f32              # x + decoded, x2 buf
    acts = 4 * block_b * max(n_in_p, n_half_p, n_hidden_p) * f32
    hsum = 2 * _SUBLANE * n_hidden_p * f32
    return io_tiles + weight_buffers * weight_bytes + acts + hsum


def _choose_tiling(batch, n_in_p, n_half_p, n_hidden_p, weight_bytes):
    b8 = _round_up(max(batch, 1), _SUBLANE)
    vmem_cap = _vmem_capacity_bytes()
    cap = 256 if vmem_cap <= (64 << 20) else 512            # v7x: 64 MiB VMEM
    while cap > _SUBLANE and _vmem_need_bytes(
            cap, n_in_p, n_half_p, n_hidden_p, weight_bytes, 2) > vmem_cap // 2:
        cap //= 2
    cap = max(cap, _SUBLANE)
    min_tiles = 1 if b8 <= _SUBLANE else 2                  # >=2 steps: megacore
    num_tiles = max(min_tiles, _cdiv(b8, cap))
    bb = b8 // num_tiles
    if num_tiles * bb == b8 and bb % _SUBLANE == 0:
        block_b = bb                                        # exact: no batch pad
    else:
        block_b = _round_up(_cdiv(b8, num_tiles), _SUBLANE)
    return num_tiles, block_b, vmem_cap


def autoencoder_forward(x, params, *, sparsity_target=0.05,
                        matmul_dtype=jnp.float32):
    """x: (B, n_in) float32.  `params` is either the raw dict of (in,out)
    weights / (1,out) biases or the cached output of prepare_params()."""
    if not params.get("_prepared", False):
        params = prepare_params(params, matmul_dtype=matmul_dtype)  # slow path
    p = params
    B, n_in = x.shape
    assert n_in == p["n_in"], "input feature dim does not match the params"
    n_in_p, n_half_p, n_hidden_p = p["n_in_p"], p["n_half_p"], p["n_hidden_p"]

    num_tiles, block_b, vmem_cap = _choose_tiling(
        B, n_in_p, n_half_p, n_hidden_p, p["weight_bytes"])
    B_pad = num_tiles * block_b
    need_row_mask = B_pad != B

    x_in = x.astype(jnp.float32)
    if B_pad != B or n_in_p != n_in:
        # Rare path: odd n_in or a batch that does not tile evenly.
        x_in = _pad2d(x_in, B_pad, n_in_p)

    kernel = functools.partial(
        _ae_tile_kernel, block_b=block_b, batch_size=B,
        matmul_dtype=p["matmul_dtype"], need_mask=need_row_mask)

    weight_args = tuple(p[k] for k in _WEIGHT_KEYS)
    vmem_limit = int(min(
        int(vmem_cap * 0.9),
        max(32 << 20,
            2 * _vmem_need_bytes(block_b, n_in_p, n_half_p, n_hidden_p,
                                 p["weight_bytes"], 2) + (2 << 20))))

    def run(single_buffer_weights):
        def const_spec(shape):
            idx = lambda i, _n=len(shape): (0,) * _n
            if single_buffer_weights:
                try:
                    return pl.BlockSpec(shape, idx,
                                        pipeline_mode=pl.Buffered(1))
                except Exception:
                    return pl.BlockSpec(shape, idx)
            return pl.BlockSpec(shape, idx)

        out = pl.pallas_call(
            kernel,
            out_shape=(
                jax.ShapeDtypeStruct((B_pad, n_in_p), jnp.float32),
                jax.ShapeDtypeStruct((num_tiles, 1, n_hidden_p), jnp.float32),
            ),
            grid_spec=pltpu.PrefetchScalarGridSpec(
                num_scalar_prefetch=0,
                grid=(num_tiles,),
                in_specs=[pl.BlockSpec((block_b, n_in_p), lambda i: (i, 0))]
                         + [const_spec(w.shape) for w in weight_args],
                out_specs=[
                    pl.BlockSpec((block_b, n_in_p), lambda i: (i, 0)),
                    pl.BlockSpec((1, 1, n_hidden_p), lambda i: (i, 0, 0)),
                ],
            ),
            compiler_params=pltpu.CompilerParams(
                dimension_semantics=("parallel",),
                vmem_limit_bytes=vmem_limit),
        )(x_in, *weight_args)
        return jax.block_until_ready(out)

    if _SINGLE_BUFFER_STATE["ok"] is False:
        decoded_p, hsum = run(False)
    else:
        try:
            decoded_p, hsum = run(True)
            _SINGLE_BUFFER_STATE["ok"] = True
        except Exception:
            _SINGLE_BUFFER_STATE["ok"] = False
            decoded_p, hsum = run(False)

    decoded = decoded_p
    if B_pad != B or n_in_p != n_in:
        decoded = decoded_p[:B, :n_in]

    # Mean hidden activation + KL sparsity penalty, finished outside the
    # kernel so the batch grid axis stays reduction-free ("parallel").
    pt = jnp.float32(sparsity_target)
    q = jnp.sum(hsum, axis=(0, 1))[: p["n_hidden"]] / jnp.float32(B)
    q = jnp.clip(q, 1e-7, 1.0 - 1e-7)   # guard fully dead / saturated units
    sparsity_loss = jnp.sum(pt * jnp.log(pt / q)
                            + (1.0 - pt) * jnp.log((1.0 - pt) / (1.0 - q)))
    return decoded, sparsity_loss


def init_params(key, n_in, n_hidden):
    """Deterministic init mimicking torch.nn.Linear's U(-1/sqrt(fan_in), ...).
    Weights are stored (in, out) so the kernel computes x @ W + b."""
    n_half = n_hidden // 2
    dims = [
        ("w1", "b1", n_in, n_half),
        ("w2", "b2", n_half, n_half),
        ("w3", "b3", n_half, n_hidden),
        ("wd", "bd", n_hidden, n_in),
    ]
    params = {}
    for wname, bname, fan_in, fan_out in dims:
        key, kw, kb = jax.random.split(key, 3)
        bound = 1.0 / jnp.sqrt(jnp.float32(fan_in))
        params[wname] = jax.random.uniform(
            kw, (fan_in, fan_out), jnp.float32, -bound, bound)
        params[bname] = jax.random.uniform(
            kb, (1, fan_out), jnp.float32, -bound, bound)
    return params


def reference_forward(x, params, sparsity_target=0.05):
    h = jax.nn.sigmoid(x @ params["w1"] + params["b1"])
    h = jax.nn.sigmoid(h @ params["w2"] + params["b2"])
    h = jax.nn.sigmoid(h @ params["w3"] + params["b3"])
    dec = h @ params["wd"] + params["bd"]
    q = jnp.mean(h, axis=0)
    p = sparsity_target
    kl = p * jnp.log(p / q) + (1 - p) * jnp.log((1 - p) / (1 - q))
    return dec, jnp.sum(kl)


if __name__ == "__main__":
    B, n_in, n_hidden = 8, 32, 16

    key = jax.random.PRNGKey(0)
    key, kx = jax.random.split(key)
    x = jax.random.uniform(kx, (B, n_in), jnp.float32)   # inputs in (0,1)
    params = init_params(key, n_in, n_hidden)
    ref_dec, ref_loss = reference_forward(x, params, 0.05)

    # --- f32 MXU path (exact semantics, strict reference check) ---
    prep_f32 = prepare_params(params, matmul_dtype=jnp.float32)  # hoisted once
    decoded, sparsity_loss = autoencoder_forward(x, prep_f32, sparsity_target=0.05)
    jax.block_until_ready((decoded, sparsity_loss))
    assert decoded.shape == (B, n_in)
    assert jnp.allclose(decoded, ref_dec, atol=1e-5, rtol=1e-5)
    assert jnp.allclose(sparsity_loss, ref_loss, atol=1e-5, rtol=1e-5)

    # --- bf16 MXU path (recommended on v6e/v7x): looser tolerance ---
    prep_bf16 = prepare_params(params, matmul_dtype=jnp.bfloat16)
    dec_b, loss_b = autoencoder_forward(x, prep_bf16, sparsity_target=0.05)
    jax.block_until_ready((dec_b, loss_b))
    assert jnp.allclose(dec_b, ref_dec, atol=1e-1, rtol=5e-2)
    assert jnp.allclose(loss_b, ref_loss, atol=1e-1, rtol=5e-2)

    print("KERNEL_OK")
</pallas_src>

<mosaic_0001>
module attributes {stable_mosaic.version = 11 : i64} {
  func.func @_ae_tile_kernel(%arg0: i32, %arg1: memref<8x32xf32, #tpu.memory_space<vmem>>, %arg2: memref<32x128xf32, #tpu.memory_space<vmem>>, %arg3: memref<1x128xf32, #tpu.memory_space<vmem>>, %arg4: memref<128x128xf32, #tpu.memory_space<vmem>>, %arg5: memref<1x128xf32, #tpu.memory_space<vmem>>, %arg6: memref<128x128xf32, #tpu.memory_space<vmem>>, %arg7: memref<1x128xf32, #tpu.memory_space<vmem>>, %arg8: memref<128x32xf32, #tpu.memory_space<vmem>>, %arg9: memref<1x32xf32, #tpu.memory_space<vmem>>, %arg10: memref<8x32xf32, #tpu.memory_space<vmem>>, %arg11: memref<1x1x128xf32, #tpu.memory_space<vmem>>) attributes {dimension_semantics = [#tpu.dimension_semantics<parallel>], iteration_bounds = array<i64: 1>, scalar_prefetch = 0 : i64, scratch_operands = 0 : i64, tpu.core_type = #tpu.core_type<tc>, window_params = [{transform_indices = @transform_0, window_bounds = array<i64: 8, 32>}, {pipeline_mode = #tpu.pipeline_mode<synchronous>, transform_indices = @transform_1, window_bounds = array<i64: 32, 128>}, {pipeline_mode = #tpu.pipeline_mode<synchronous>, transform_indices = @transform_2, window_bounds = array<i64: 1, 128>}, {pipeline_mode = #tpu.pipeline_mode<synchronous>, transform_indices = @transform_3, window_bounds = array<i64: 128, 128>}, {pipeline_mode = #tpu.pipeline_mode<synchronous>, transform_indices = @transform_4, window_bounds = array<i64: 1, 128>}, {pipeline_mode = #tpu.pipeline_mode<synchronous>, transform_indices = @transform_5, window_bounds = array<i64: 128, 128>}, {pipeline_mode = #tpu.pipeline_mode<synchronous>, transform_indices = @transform_6, window_bounds = array<i64: 1, 128>}, {pipeline_mode = #tpu.pipeline_mode<synchronous>, transform_indices = @transform_7, window_bounds = array<i64: 128, 32>}, {pipeline_mode = #tpu.pipeline_mode<synchronous>, transform_indices = @transform_8, window_bounds = array<i64: 1, 32>}, {transform_indices = @transform_9, window_bounds = array<i64: 8, 32>}, {transform_indices = @transform_10, window_bounds = array<i64: 1, 1, 128>}]} {
    %c0 = arith.constant 0 : index
    %c0_0 = arith.constant 0 : index
    %0 = vector.load %arg1[%c0, %c0_0] : memref<8x32xf32, #tpu.memory_space<vmem>>, vector<8x32xf32>
    %c0_1 = arith.constant 0 : index
    %c0_2 = arith.constant 0 : index
    %1 = vector.load %arg2[%c0_1, %c0_2] : memref<32x128xf32, #tpu.memory_space<vmem>>, vector<32x128xf32>
    %cst = arith.constant dense<0.000000e+00> : vector<8x128xf32>
    %2 = tpu.matmul %0, %1, %cst {dimension_numbers = #tpu.dot_dimension_numbers<[1], [0], [0], [1], [0, 0, 1, 1], [], []>} : vector<8x32xf32>, vector<32x128xf32>, vector<8x128xf32> -> vector<8x128xf32>
    %c0_3 = arith.constant 0 : index
    %c0_4 = arith.constant 0 : index
    %3 = vector.load %arg3[%c0_3, %c0_4] : memref<1x128xf32, #tpu.memory_space<vmem>>, vector<1x128xf32>
    %4 = vector.broadcast %3 : vector<1x128xf32> to vector<8x128xf32>
    %5 = arith.addf %2, %4 : vector<8x128xf32>
    %6 = arith.negf %5 : vector<8x128xf32>
    %7 = math.exp %6 : vector<8x128xf32>
    %cst_5 = arith.constant 1.000000e+00 : f32
    %8 = vector.broadcast %cst_5 : f32 to vector<8x128xf32>
    %9 = arith.addf %8, %7 : vector<8x128xf32>
    %10 = arith.divf %8, %9 : vector<8x128xf32>
    %c0_6 = arith.constant 0 : index
    %c0_7 = arith.constant 0 : index
    %11 = vector.load %arg4[%c0_6, %c0_7] : memref<128x128xf32, #tpu.memory_space<vmem>>, vector<128x128xf32>
    %cst_8 = arith.constant dense<0.000000e+00> : vector<8x128xf32>
    %12 = tpu.matmul %10, %11, %cst_8 {dimension_numbers = #tpu.dot_dimension_numbers<[1], [0], [0], [1], [0, 0, 1, 1], [], []>} : vector<8x128xf32>, vector<128x128xf32>, vector<8x128xf32> -> vector<8x128xf32>
    %c0_9 = arith.constant 0 : index
    %c0_10 = arith.constant 0 : index
    %13 = vector.load %arg5[%c0_9, %c0_10] : memref<1x128xf32, #tpu.memory_space<vmem>>, vector<1x128xf32>
    %14 = vector.broadcast %13 : vector<1x128xf32> to vector<8x128xf32>
    %15 = arith.addf %12, %14 : vector<8x128xf32>
    %16 = arith.negf %15 : vector<8x128xf32>
    %17 = math.exp %16 : vector<8x128xf32>
    %cst_11 = arith.constant 1.000000e+00 : f32
    %18 = vector.broadcast %cst_11 : f32 to vector<8x128xf32>
    %19 = arith.addf %18, %17 : vector<8x128xf32>
    %20 = arith.divf %18, %19 : vector<8x128xf32>
    %c0_12 = arith.constant 0 : index
    %c0_13 = arith.constant 0 : index
    %21 = vector.load %arg6[%c0_12, %c0_13] : memref<128x128xf32, #tpu.memory_space<vmem>>, vector<128x128xf32>
    %cst_14 = arith.constant dense<0.000000e+00> : vector<8x128xf32>
    %22 = tpu.matmul %20, %21, %cst_14 {dimension_numbers = #tpu.dot_dimension_numbers<[1], [0], [0], [1], [0, 0, 1, 1], [], []>} : vector<8x128xf32>, vector<128x128xf32>, vector<8x128xf32> -> vector<8x128xf32>
    %c0_15 = arith.constant 0 : index
    %c0_16 = arith.constant 0 : index
    %23 = vector.load %arg7[%c0_15, %c0_16] : memref<1x128xf32, #tpu.memory_space<vmem>>, vector<1x128xf32>
    %24 = vector.broadcast %23 : vector<1x128xf32> to vector<8x128xf32>
    %25 = arith.addf %22, %24 : vector<8x128xf32>
    %26 = arith.negf %25 : vector<8x128xf32>
    %27 = math.exp %26 : vector<8x128xf32>
    %cst_17 = arith.constant 1.000000e+00 : f32
    %28 = vector.broadcast %cst_17 : f32 to vector<8x128xf32>
    %29 = arith.addf %28, %27 : vector<8x128xf32>
    %30 = arith.divf %28, %29 : vector<8x128xf32>
    %c0_18 = arith.constant 0 : index
    %c0_19 = arith.constant 0 : index
    %31 = vector.load %arg8[%c0_18, %c0_19] : memref<128x32xf32, #tpu.memory_space<vmem>>, vector<128x32xf32>
    %cst_20 = arith.constant dense<0.000000e+00> : vector<8x32xf32>
    %32 = tpu.matmul %30, %31, %cst_20 {dimension_numbers = #tpu.dot_dimension_numbers<[1], [0], [0], [1], [0, 0, 1, 1], [], []>} : vector<8x128xf32>, vector<128x32xf32>, vector<8x32xf32> -> vector<8x32xf32>
    %c0_21 = arith.constant 0 : index
    %c0_22 = arith.constant 0 : index
    %33 = vector.load %arg9[%c0_21, %c0_22] : memref<1x32xf32, #tpu.memory_space<vmem>>, vector<1x32xf32>
    %34 = vector.broadcast %33 : vector<1x32xf32> to vector<8x32xf32>
    %35 = arith.addf %32, %34 : vector<8x32xf32>
    %c0_23 = arith.constant 0 : index
    %c0_24 = arith.constant 0 : index
    %36 = vector.load %arg10[%c0_23, %c0_24] : memref<8x32xf32, #tpu.memory_space<vmem>>, vector<8x32xf32>
    tpu.vector_store %arg10[%c0_23, %c0_24], %35 {strides = array<i32>} : memref<8x32xf32, #tpu.memory_space<vmem>>, vector<8x32xf32>,
    %cst_25 = arith.constant dense<0.000000e+00> : vector<128xf32>
    %37 = vector.multi_reduction <add>, %30, %cst_25 [0] : vector<8x128xf32> to vector<128xf32>
    %38 = vector.shape_cast %37 : vector<128xf32> to vector<1x128xf32>
    %39 = vector.shape_cast %38 : vector<1x128xf32> to vector<1x1x128xf32>
    %c0_26 = arith.constant 0 : index
    %c0_27 = arith.constant 0 : index
    %c0_28 = arith.constant 0 : index
    %40 = vector.load %arg11[%c0_26, %c0_27, %c0_28] : memref<1x1x128xf32, #tpu.memory_space<vmem>>, vector<1x1x128xf32>
    tpu.vector_store %arg11[%c0_26, %c0_27, %c0_28], %39 {strides = array<i32>} : memref<1x1x128xf32, #tpu.memory_space<vmem>>, vector<1x1x128xf32>,
    return
  }
  func.func @transform_0(%arg0: i32) -> (i32, i32) {
    %c0_i32 = arith.constant 0 : i32
    %c0_i32_0 = arith.constant 0 : i32
    return %arg0, %c0_i32 : i32, i32
  }
  func.func @transform_1(%arg0: i32) -> (i32, i32) {
    %c0_i32 = arith.constant 0 : i32
    %c0_i32_0 = arith.constant 0 : i32
    %c0_i32_1 = arith.constant 0 : i32
    return %c0_i32, %c0_i32_0 : i32, i32
  }
  func.func @transform_2(%arg0: i32) -> (i32, i32) {
    %c0_i32 = arith.constant 0 : i32
    %c0_i32_0 = arith.constant 0 : i32
    %c0_i32_1 = arith.constant 0 : i32
    return %c0_i32, %c0_i32_0 : i32, i32
  }
  func.func @transform_3(%arg0: i32) -> (i32, i32) {
    %c0_i32 = arith.constant 0 : i32
    %c0_i32_0 = arith.constant 0 : i32
    %c0_i32_1 = arith.constant 0 : i32
    return %c0_i32, %c0_i32_0 : i32, i32
  }
  func.func @transform_4(%arg0: i32) -> (i32, i32) {
    %c0_i32 = arith.constant 0 : i32
    %c0_i32_0 = arith.constant 0 : i32
    %c0_i32_1 = arith.constant 0 : i32
    return %c0_i32, %c0_i32_0 : i32, i32
  }
  func.func @transform_5(%arg0: i32) -> (i32, i32) {
    %c0_i32 = arith.constant 0 : i32
    %c0_i32_0 = arith.constant 0 : i32
    %c0_i32_1 = arith.constant 0 : i32
    return %c0_i32, %c0_i32_0 : i32, i32
  }
  func.func @transform_6(%arg0: i32) -> (i32, i32) {
    %c0_i32 = arith.constant 0 : i32
    %c0_i32_0 = arith.constant 0 : i32
    %c0_i32_1 = arith.constant 0 : i32
    return %c0_i32, %c0_i32_0 : i32, i32
  }
  func.func @transform_7(%arg0: i32) -> (i32, i32) {
    %c0_i32 = arith.constant 0 : i32
    %c0_i32_0 = arith.constant 0 : i32
    %c0_i32_1 = arith.constant 0 : i32
    return %c0_i32, %c0_i32_0 : i32, i32
  }
  func.func @transform_8(%arg0: i32) -> (i32, i32) {
    %c0_i32 = arith.constant 0 : i32
    %c0_i32_0 = arith.constant 0 : i32
    %c0_i32_1 = arith.constant 0 : i32
    return %c0_i32, %c0_i32_0 : i32, i32
  }
  func.func @transform_9(%arg0: i32) -> (i32, i32) {
    %c0_i32 = arith.constant 0 : i32
    %c0_i32_0 = arith.constant 0 : i32
    return %arg0, %c0_i32 : i32, i32
  }
  func.func @transform_10(%arg0: i32) -> (i32, i32, i32) {
    %c0_i32 = arith.constant 0 : i32
    %c0_i32_0 = arith.constant 0 : i32
    %c0_i32_1 = arith.constant 0 : i32
    return %arg0, %c0_i32, %c0_i32_0 : i32, i32, i32
  }
}

module attributes {stable_mosaic.version = 11 : i64} {
  func.func @_ae_tile_kernel(%arg0: i32, %arg1: memref<8x32xf32, #tpu.memory_space<vmem>>, %arg2: memref<32x128xf32, #tpu.memory_space<vmem>>, %arg3: memref<1x128xf32, #tpu.memory_space<vmem>>, %arg4: memref<128x128xf32, #tpu.memory_space<vmem>>, %arg5: memref<1x128xf32, #tpu.memory_space<vmem>>, %arg6: memref<128x128xf32, #tpu.memory_space<vmem>>, %arg7: memref<1x128xf32, #tpu.memory_space<vmem>>, %arg8: memref<128x32xf32, #tpu.memory_space<vmem>>, %arg9: memref<1x32xf32, #tpu.memory_space<vmem>>, %arg10: memref<8x32xf32, #tpu.memory_space<vmem>>, %arg11: memref<1x1x128xf32, #tpu.memory_space<vmem>>) attributes {dimension_semantics = [#tpu.dimension_semantics<parallel>], iteration_bounds = array<i64: 1>, scalar_prefetch = 0 : i64, scratch_operands = 0 : i64, tpu.core_type = #tpu.core_type<tc>, window_params = [{transform_indices = @transform_0, window_bounds = array<i64: 8, 32>}, {pipeline_mode = #tpu.pipeline_mode<synchronous>, transform_indices = @transform_1, window_bounds = array<i64: 32, 128>}, {pipeline_mode = #tpu.pipeline_mode<synchronous>, transform_indices = @transform_2, window_bounds = array<i64: 1, 128>}, {pipeline_mode = #tpu.pipeline_mode<synchronous>, transform_indices = @transform_3, window_bounds = array<i64: 128, 128>}, {pipeline_mode = #tpu.pipeline_mode<synchronous>, transform_indices = @transform_4, window_bounds = array<i64: 1, 128>}, {pipeline_mode = #tpu.pipeline_mode<synchronous>, transform_indices = @transform_5, window_bounds = array<i64: 128, 128>}, {pipeline_mode = #tpu.pipeline_mode<synchronous>, transform_indices = @transform_6, window_bounds = array<i64: 1, 128>}, {pipeline_mode = #tpu.pipeline_mode<synchronous>, transform_indices = @transform_7, window_bounds = array<i64: 128, 32>}, {pipeline_mode = #tpu.pipeline_mode<synchronous>, transform_indices = @transform_8, window_bounds = array<i64: 1, 32>}, {transform_indices = @transform_9, window_bounds = array<i64: 8, 32>}, {transform_indices = @transform_10, window_bounds = array<i64: 1, 1, 128>}]} {
    %c0 = arith.constant 0 : index
    %c0_0 = arith.constant 0 : index
    %0 = vector.load %arg1[%c0, %c0_0] : memref<8x32xf32, #tpu.memory_space<vmem>>, vector<8x32xf32>
    %c0_1 = arith.constant 0 : index
    %c0_2 = arith.constant 0 : index
    %1 = vector.load %arg2[%c0_1, %c0_2] : memref<32x128xf32, #tpu.memory_space<vmem>>, vector<32x128xf32>
    %cst = arith.constant dense<0.000000e+00> : vector<8x128xf32>
    %2 = tpu.matmul %0, %1, %cst {dimension_numbers = #tpu.dot_dimension_numbers<[1], [0], [0], [1], [0, 0, 1, 1], [], []>} : vector<8x32xf32>, vector<32x128xf32>, vector<8x128xf32> -> vector<8x128xf32>
    %c0_3 = arith.constant 0 : index
    %c0_4 = arith.constant 0 : index
    %3 = vector.load %arg3[%c0_3, %c0_4] : memref<1x128xf32, #tpu.memory_space<vmem>>, vector<1x128xf32>
    %4 = vector.broadcast %3 : vector<1x128xf32> to vector<8x128xf32>
    %5 = arith.addf %2, %4 : vector<8x128xf32>
    %6 = arith.negf %5 : vector<8x128xf32>
    %7 = math.exp %6 : vector<8x128xf32>
    %cst_5 = arith.constant 1.000000e+00 : f32
    %8 = vector.broadcast %cst_5 : f32 to vector<8x128xf32>
    %9 = arith.addf %8, %7 : vector<8x128xf32>
    %10 = arith.divf %8, %9 : vector<8x128xf32>
    %c0_6 = arith.constant 0 : index
    %c0_7 = arith.constant 0 : index
    %11 = vector.load %arg4[%c0_6, %c0_7] : memref<128x128xf32, #tpu.memory_space<vmem>>, vector<128x128xf32>
    %cst_8 = arith.constant dense<0.000000e+00> : vector<8x128xf32>
    %12 = tpu.matmul %10, %11, %cst_8 {dimension_numbers = #tpu.dot_dimension_numbers<[1], [0], [0], [1], [0, 0, 1, 1], [], []>} : vector<8x128xf32>, vector<128x128xf32>, vector<8x128xf32> -> vector<8x128xf32>
    %c0_9 = arith.constant 0 : index
    %c0_10 = arith.constant 0 : index
    %13 = vector.load %arg5[%c0_9, %c0_10] : memref<1x128xf32, #tpu.memory_space<vmem>>, vector<1x128xf32>
    %14 = vector.broadcast %13 : vector<1x128xf32> to vector<8x128xf32>
    %15 = arith.addf %12, %14 : vector<8x128xf32>
    %16 = arith.negf %15 : vector<8x128xf32>
    %17 = math.exp %16 : vector<8x128xf32>
    %cst_11 = arith.constant 1.000000e+00 : f32
    %18 = vector.broadcast %cst_11 : f32 to vector<8x128xf32>
    %19 = arith.addf %18, %17 : vector<8x128xf32>
    %20 = arith.divf %18, %19 : vector<8x128xf32>
    %c0_12 = arith.constant 0 : index
    %c0_13 = arith.constant 0 : index
    %21 = vector.load %arg6[%c0_12, %c0_13] : memref<128x128xf32, #tpu.memory_space<vmem>>, vector<128x128xf32>
    %cst_14 = arith.constant dense<0.000000e+00> : vector<8x128xf32>
    %22 = tpu.matmul %20, %21, %cst_14 {dimension_numbers = #tpu.dot_dimension_numbers<[1], [0], [0], [1], [0, 0, 1, 1], [], []>} : vector<8x128xf32>, vector<128x128xf32>, vector<8x128xf32> -> vector<8x128xf32>
    %c0_15 = arith.constant 0 : index
    %c0_16 = arith.constant 0 : index
    %23 = vector.load %arg7[%c0_15, %c0_16] : memref<1x128xf32, #tpu.memory_space<vmem>>, vector<1x128xf32>
    %24 = vector.broadcast %23 : vector<1x128xf32> to vector<8x128xf32>
    %25 = arith.addf %22, %24 : vector<8x128xf32>
    %26 = arith.negf %25 : vector<8x128xf32>
    %27 = math.exp %26 : vector<8x128xf32>
    %cst_17 = arith.constant 1.000000e+00 : f32
    %28 = vector.broadcast %cst_17 : f32 to vector<8x128xf32>
    %29 = arith.addf %28, %27 : vector<8x128xf32>
    %30 = arith.divf %28, %29 : vector<8x128xf32>
    %c0_18 = arith.constant 0 : index
    %c0_19 = arith.constant 0 : index
    %31 = vector.load %arg8[%c0_18, %c0_19] : memref<128x32xf32, #tpu.memory_space<vmem>>, vector<128x32xf32>
    %cst_20 = arith.constant dense<0.000000e+00> : vector<8x32xf32>
    %32 = tpu.matmul %30, %31, %cst_20 {dimension_numbers = #tpu.dot_dimension_numbers<[1], [0], [0], [1], [0, 0, 1, 1], [], []>} : vector<8x128xf32>, vector<128x32xf32>, vector<8x32xf32> -> vector<8x32xf32>
    %c0_21 = arith.constant 0 : index
    %c0_22 = arith.constant 0 : index
    %33 = vector.load %arg9[%c0_21, %c0_22] : memref<1x32xf32, #tpu.memory_space<vmem>>, vector<1x32xf32>
    %34 = vector.broadcast %33 : vector<1x32xf32> to vector<8x32xf32>
    %35 = arith.addf %32, %34 : vector<8x32xf32>
    %c0_23 = arith.constant 0 : index
    %c0_24 = arith.constant 0 : index
    %36 = vector.load %arg10[%c0_23, %c0_24] : memref<8x32xf32, #tpu.memory_space<vmem>>, vector<8x32xf32>
    tpu.vector_store %arg10[%c0_23, %c0_24], %35 {strides = array<i32>} : memref<8x32xf32, #tpu.memory_space<vmem>>, vector<8x32xf32>,
    %cst_25 = arith.constant dense<0.000000e+00> : vector<128xf32>
    %37 = vector.multi_reduction <add>, %30, %cst_25 [0] : vector<8x128xf32> to vector<128xf32>
    %38 = vector.shape_cast %37 : vector<128xf32> to vector<1x128xf32>
    %39 = vector.shape_cast %38 : vector<1x128xf32> to vector<1x1x128xf32>
    %c0_26 = arith.constant 0 : index
    %c0_27 = arith.constant 0 : index
    %c0_28 = arith.constant 0 : index
    %40 = vector.load %arg11[%c0_26, %c0_27, %c0_28] : memref<1x1x128xf32, #tpu.memory_space<vmem>>, vector<1x1x128xf32>
    tpu.vector_store %arg11[%c0_26, %c0_27, %c0_28], %39 {strides = array<i32>} : memref<1x1x128xf32, #tpu.memory_space<vmem>>, vector<1x1x128xf32>,
    return
  }
  func.func @transform_0(%arg0: i32) -> (i32, i32) {
    %c0_i32 = arith.constant 0 : i32
    %c0_i32_0 = arith.constant 0 : i32
    return %arg0, %c0_i32 : i32, i32
  }
  func.func @transform_1(%arg0: i32) -> (i32, i32) {
    %c0_i32 = arith.constant 0 : i32
    %c0_i32_0 = arith.constant 0 : i32
    %c0_i32_1 = arith.constant 0 : i32
    return %c0_i32, %c0_i32_0 : i32, i32
  }
  func.func @transform_2(%arg0: i32) -> (i32, i32) {
    %c0_i32 = arith.constant 0 : i32
    %c0_i32_0 = arith.constant 0 : i32
    %c0_i32_1 = arith.constant 0 : i32
    return %c0_i32, %c0_i32_0 : i32, i32
  }
  func.func @transform_3(%arg0: i32) -> (i32, i32) {
    %c0_i32 = arith.constant 0 : i32
    %c0_i32_0 = arith.constant 0 : i32
    %c0_i32_1 = arith.constant 0 : i32
    return %c0_i32, %c0_i32_0 : i32, i32
  }
  func.func @transform_4(%arg0: i32) -> (i32, i32) {
    %c0_i32 = arith.constant 0 : i32
    %c0_i32_0 = arith.constant 0 : i32
    %c0_i32_1 = arith.constant 0 : i32
    return %c0_i32, %c0_i32_0 : i32, i32
  }
  func.func @transform_5(%arg0: i32) -> (i32, i32) {
    %c0_i32 = arith.constant 0 : i32
    %c0_i32_0 = arith.constant 0 : i32
    %c0_i32_1 = arith.constant 0 : i32
    return %c0_i32, %c0_i32_0 : i32, i32
  }
  func.func @transform_6(%arg0: i32) -> (i32, i32) {
    %c0_i32 = arith.constant 0 : i32
    %c0_i32_0 = arith.constant 0 : i32
    %c0_i32_1 = arith.constant 0 : i32
    return %c0_i32, %c0_i32_0 : i32, i32
  }
  func.func @transform_7(%arg0: i32) -> (i32, i32) {
    %c0_i32 = arith.constant 0 : i32
    %c0_i32_0 = arith.constant 0 : i32
    %c0_i32_1 = arith.constant 0 : i32
    return %c0_i32, %c0_i32_0 : i32, i32
  }
  func.func @transform_8(%arg0: i32) -> (i32, i32) {
    %c0_i32 = arith.constant 0 : i32
    %c0_i32_0 = arith.constant 0 : i32
    %c0_i32_1 = arith.constant 0 : i32
    return %c0_i32, %c0_i32_0 : i32, i32
  }
  func.func @transform_9(%arg0: i32) -> (i32, i32) {
    %c0_i32 = arith.constant 0 : i32
    %c0_i32_0 = arith.constant 0 : i32
    return %arg0, %c0_i32 : i32, i32
  }
  func.func @transform_10(%arg0: i32) -> (i32, i32, i32) {
    %c0_i32 = arith.constant 0 : i32
    %c0_i32_0 = arith.constant 0 : i32
    %c0_i32_1 = arith.constant 0 : i32
    return %arg0, %c0_i32, %c0_i32_0 : i32, i32, i32
  }
}

</mosaic_0001>

<llo_original>
// kernel: tpu_custom_call.1
$region0: #{tpu_custom_call.1}
  #allocation0 [shape = 'u32[]', space=smem, size = 0x4, offset = 0x4, fixed_abs, tag = 'smem constant byte address 0x4 - core index']
  #allocation1 [shape = 'u32[72,128]{1,0:T(1,128)}', space=vmem, size = 0x9000, scoped, tag = 'internal scratch']
  %s0 = inlined_call_operand.hbm [shape: f32[8,32], index: 0, kind: input, shape index: {}]
  %s1 = inlined_call_operand.vmem [shape: f32[32,128], index: 1, kind: input, shape index: {}]
  %s2 = inlined_call_operand.vmem [shape: f32[1,128], index: 2, kind: input, shape index: {}]
  %s3 = inlined_call_operand.vmem [shape: f32[128,128], index: 3, kind: input, shape index: {}]
  %s4 = inlined_call_operand.vmem [shape: f32[1,128], index: 4, kind: input, shape index: {}]
  %s5 = inlined_call_operand.hbm [shape: f32[128,128], index: 5, kind: input, shape index: {}]
  %s6 = inlined_call_operand.vmem [shape: f32[1,128], index: 6, kind: input, shape index: {}]
  %s7 = inlined_call_operand.vmem [shape: f32[128,32], index: 7, kind: input, shape index: {}]
  %s8 = inlined_call_operand.vmem [shape: f32[1,32], index: 8, kind: input, shape index: {}]
  %s9 = inlined_call_operand.hbm [shape: f32[8,32], index: 9, kind: output, shape index: {0}]
  %s10 = inlined_call_operand.hbm [shape: f32[1,1,128], index: 10, kind: output, shape index: {1}]
  %11 = xla_tuple %s9, %s10
  %s12 = sld [smem:[#allocation0]]
  $region62: #{tpu_custom_call.1} parent=0
    _
  %s14 = ssub.s32 1, %s12
  %s15 = scalar_select 0, %s14, %s12
  $region1: #{tpu_custom_call.1} parent=0
    #allocation2 [shape = 'u8[4096]{0}', space=vmem, size = 0x1000, scoped, tag = 'input window, operand 0, single buffered']
    #allocation3 [shape = 's32[1]{0}', space=sflag, size = 0x4, scoped, tag = 'scoped memory for tpu_custom_call.1']
    #allocation4 [shape = 's32[1]{0}', space=sflag, size = 0x4, scoped, tag = 'scoped memory for tpu_custom_call.1']
    #allocation5 [shape = 'u8[65536]{0}', space=vmem, size = 0x10000, scoped, tag = 'input window, operand 5, single buffered']
    #allocation6 [shape = 's32[1]{0}', space=sflag, size = 0x4, scoped, tag = 'scoped memory for tpu_custom_call.1']
    #allocation7 [shape = 'u8[4096]{0}', space=vmem, size = 0x1000, scoped, tag = 'output window, operand 0, single buffered']
    #allocation8 [shape = 'u8[512]{0}', space=vmem, size = 0x400, scoped, tag = 'output window, operand 1, single buffered']
    #allocation9 [shape = 's32[1]{0}', space=sflag, size = 0x4, scoped, tag = 'scoped memory for tpu_custom_call.1']
    %16 = vsyncpa [#allocation3], 0
    %17 = vsyncpa [#allocation6], 0
    %18 = vsyncpa [#allocation4], 0
    %19 = vsyncpa [#allocation9], 0
    // Predicated region
    $region2: #{tpu_custom_call.1} parent=1 // pred_check
      _
    $region3: #{tpu_custom_call.1} parent=1 // pred_check_branch
      %21 = sbr.rel (0) target = $region5
    $region4: #{tpu_custom_call.1} parent=1 // pred_region
      %23 = vsyncadd [#allocation3], 0
      %s25 = sshll.u32 %s0, 4
      %s26 = int_to_ptr.hbm [resolvable:$true] %s25
      %s27 = sshll.u32 [#allocation2], 4
      %s28 = int_to_ptr.vmem [resolvable:$true] %s27
      %30 = dma.hbm_to_vmem [thread:$0]  %s26, 128, %s28, [#allocation3]
    $region5: #{tpu_custom_call.1} parent=1 // pred_fallthru
      _
    // Predicated region
    $region6: #{tpu_custom_call.1} parent=1 // pred_check
      _
    $region7: #{tpu_custom_call.1} parent=1 // pred_check_branch
      %32 = sbr.rel (0) target = $region9
    $region8: #{tpu_custom_call.1} parent=1 // pred_region
      _
    $region9: #{tpu_custom_call.1} parent=1 // pred_fallthru
      _
    // Predicated region
    $region10: #{tpu_custom_call.1} parent=1 // pred_check
      _
    $region11: #{tpu_custom_call.1} parent=1 // pred_check_branch
      %34 = sbr.rel (0) target = $region13
    $region12: #{tpu_custom_call.1} parent=1 // pred_region
      _
    $region13: #{tpu_custom_call.1} parent=1 // pred_fallthru
      _
    // Predicated region
    $region14: #{tpu_custom_call.1} parent=1 // pred_check
      _
    $region15: #{tpu_custom_call.1} parent=1 // pred_check_branch
      %36 = sbr.rel (0) target = $region17
    $region16: #{tpu_custom_call.1} parent=1 // pred_region
      _
    $region17: #{tpu_custom_call.1} parent=1 // pred_fallthru
      _
    // Predicated region
    $region18: #{tpu_custom_call.1} parent=1 // pred_check
      _
    $region19: #{tpu_custom_call.1} parent=1 // pred_check_branch
      %38 = sbr.rel (0) target = $region21
    $region20: #{tpu_custom_call.1} parent=1 // pred_region
      _
    $region21: #{tpu_custom_call.1} parent=1 // pred_fallthru
      _
    // Predicated region
    $region22: #{tpu_custom_call.1} parent=1 // pred_check
      _
    $region23: #{tpu_custom_call.1} parent=1 // pred_check_branch
      %40 = sbr.rel (0) target = $region25
    $region24: #{tpu_custom_call.1} parent=1 // pred_region
      %42 = vsyncadd [#allocation6], 0
      %s43 = sshll.u32 %s5, 4
      %s44 = int_to_ptr.hbm [resolvable:$true] %s43
      %s45 = sshll.u32 [#allocation5], 4
      %s46 = int_to_ptr.vmem [resolvable:$true] %s45
      %51 = dma.hbm_to_vmem [thread:$0]  %s44, 2048, %s46, [#allocation6], 128, 128, 8
    $region25: #{tpu_custom_call.1} parent=1 // pred_fallthru
      _
    // Predicated region
    $region26: #{tpu_custom_call.1} parent=1 // pred_check
      _
    $region27: #{tpu_custom_call.1} parent=1 // pred_check_branch
      %53 = sbr.rel (0) target = $region29
    $region28: #{tpu_custom_call.1} parent=1 // pred_region
      _
    $region29: #{tpu_custom_call.1} parent=1 // pred_fallthru
      _
    // Predicated region
    $region30: #{tpu_custom_call.1} parent=1 // pred_check
      _
    $region31: #{tpu_custom_call.1} parent=1 // pred_check_branch
      %55 = sbr.rel (0) target = $region33
    $region32: #{tpu_custom_call.1} parent=1 // pred_region
      _
    $region33: #{tpu_custom_call.1} parent=1 // pred_fallthru
      _
    // Predicated region
    $region34: #{tpu_custom_call.1} parent=1 // pred_check
      _
    $region35: #{tpu_custom_call.1} parent=1 // pred_check_branch
      %57 = sbr.rel (0) target = $region37
    $region36: #{tpu_custom_call.1} parent=1 // pred_region
      _
    $region37: #{tpu_custom_call.1} parent=1 // pred_fallthru
      _
    // Predicated region
    $region38: #{tpu_custom_call.1} parent=1 // pred_check
      _
    $region39: #{tpu_custom_call.1} parent=1 // pred_check_branch
      %59 = sbr.rel (0) target = $region41
    $region40: #{tpu_custom_call.1} parent=1 // pred_region
      %61 = dma.done [#allocation3], 128
    $region41: #{tpu_custom_call.1} parent=1 // pred_fallthru
      _
    // Predicated region
    $region42: #{tpu_custom_call.1} parent=1 // pred_check
      _
    $region43: #{tpu_custom_call.1} parent=1 // pred_check_branch
      %63 = sbr.rel (0) target = $region45
    $region44: #{tpu_custom_call.1} parent=1 // pred_region
      %65 = dma.done [#allocation6], 2048
    $region45: #{tpu_custom_call.1} parent=1 // pred_fallthru
      _
    %v66 = vld [vmem:[#allocation2] sm:$0xff]
    %v67 = vld [vmem:[%s1] sm:$0xff]
    %v68 = vld [vmem:[%s1 + $0x8] sm:$0xff]
    %v69 = vld [vmem:[%s1 + $0x10] sm:$0xff]
    %v70 = vld [vmem:[%s1 + $0x18] sm:$0xff]
    %v71 = vld [vmem:[%s2] sm:$0x1]
    %v73 = vperm.slane %v71, 0
    %vm75 = vcmask 261120
    %v77 = vsel %vm75, %v66, 0
    %79 = vmatpush.msra.mxu0 0.0
    %80 = vmatpush.msra.mxu0 0.0
    %81 = vmatpush.msra.mxu0 0.0
    %82 = vmatpush.msra.mxu0 0.0
    %83 = vmatpush.msra.mxu0 0.0
    %84 = vmatpush.msra.mxu0 0.0
    %85 = vmatpush.msra.mxu0 0.0
    %86 = vmatpush.msra.mxu0 0.0
    %87 = vmatpush.msra.mxu0 0.0
    %88 = vmatpush.msra.mxu0 0.0
    %89 = vmatpush.msra.mxu0 0.0
    %90 = vmatpush.msra.mxu0 0.0
    %91 = vmatpush.msra.mxu0 %v70
    %92 = vmatpush.msra.mxu0 %v69
    %93 = vmatpush.msra.mxu0 %v68
    %94 = vmatpush.msra.mxu0 %v67
    %95 = vmatmul.f32.gmra.mxu0 %v77
    %v96 = vpop.f32.mrf.mxu0
    %v97 = vadd.f32 %v73, %v96
    %98 = vdwg.mxu0
    %v99 = vxor.u32 %v97, 2147483648
    %v100 = vmul.f32 %v99, 1.442695
    %v101 = vpow.pop %v100
    %v102 = vadd.f32 %v101, 1.0
    %v103 = vrcp.pop %v102
    %v104 = vmul.f32 %v102, %v103
    %v105 = vsub.f32 1.0, %v104
    %v106 = vmul.f32 %v103, %v105
    %v107 = vadd.f32 %v103, %v106
    %vm108 = vweird.f32 %v102
    %vm109 = vweird.f32 %v103
    %vm110 = vmor %vm108, %vm109
    %v111 = vsel %vm110, %v103, %v107
    %v112 = vand.u32 2147483647, %v102
    %vm113 = vcmp.eq.f32.partialorder %v112, 8.507059e+37
    %v114 = vand.u32 %v102, 2147483648
    %v115 = vor.u32 1.1754944e-38, %v114
    %v116 = vsel %vm113, %v115, %v111
    %v117 = vmul.f32 1.0, %v116
    %v118 = vld [vmem:[%s3] sm:$0xff]
    %v119 = vld [vmem:[%s3 + $0x8] sm:$0xff]
    %v120 = vld [vmem:[%s3 + $0x10] sm:$0xff]
    %v121 = vld [vmem:[%s3 + $0x18] sm:$0xff]
    %v122 = vld [vmem:[%s3 + $0x20] sm:$0xff]
    %v123 = vld [vmem:[%s3 + $0x28] sm:$0xff]
    %v124 = vld [vmem:[%s3 + $0x30] sm:$0xff]
    %v125 = vld [vmem:[%s3 + $0x38] sm:$0xff]
    %v126 = vld [vmem:[%s3 + $0x40] sm:$0xff]
    %v127 = vld [vmem:[%s3 + $0x48] sm:$0xff]
    %v128 = vld [vmem:[%s3 + $0x50] sm:$0xff]
    %v129 = vld [vmem:[%s3 + $0x58] sm:$0xff]
    %v130 = vld [vmem:[%s3 + $0x60] sm:$0xff]
    %v131 = vld [vmem:[%s3 + $0x68] sm:$0xff]
    %v132 = vld [vmem:[%s3 + $0x70] sm:$0xff]
    %v133 = vld [vmem:[%s3 + $0x78] sm:$0xff]
    %v134 = vld [vmem:[%s4] sm:$0x1]
    %v136 = vperm.slane %v134, 0
    %138 = vmatpush.msra.mxu0 %v133
    %139 = vmatpush.msra.mxu0 %v132
    %140 = vmatpush.msra.mxu0 %v131
    %141 = vmatpush.msra.mxu0 %v130
    %142 = vmatpush.msra.mxu0 %v129
    %143 = vmatpush.msra.mxu0 %v128
    %144 = vmatpush.msra.mxu0 %v127
    %145 = vmatpush.msra.mxu0 %v126
    %146 = vmatpush.msra.mxu0 %v125
    %147 = vmatpush.msra.mxu0 %v124
    %148 = vmatpush.msra.mxu0 %v123
    %149 = vmatpush.msra.mxu0 %v122
    %150 = vmatpush.msra.mxu0 %v121
    %151 = vmatpush.msra.mxu0 %v120
    %152 = vmatpush.msra.mxu0 %v119
    %153 = vmatpush.msra.mxu0 %v118
    %154 = vmatmul.f32.gmra.mxu0 %v117
    %v155 = vpop.f32.mrf.mxu0
    %v156 = vadd.f32 %v136, %v155
    %157 = vdwg.mxu0
    %v158 = vxor.u32 %v156, 2147483648
    %v159 = vmul.f32 %v158, 1.442695
    %v160 = vpow.pop %v159
    %v161 = vadd.f32 %v160, 1.0
    %v162 = vrcp.pop %v161
    %v163 = vmul.f32 %v161, %v162
    %v164 = vsub.f32 1.0, %v163
    %v165 = vmul.f32 %v162, %v164
    %v166 = vadd.f32 %v162, %v165
    %vm167 = vweird.f32 %v161
    %vm168 = vweird.f32 %v162
    %vm169 = vmor %vm167, %vm168
    %v170 = vsel %vm169, %v162, %v166
    %v171 = vand.u32 2147483647, %v161
    %vm172 = vcmp.eq.f32.partialorder %v171, 8.507059e+37
    %v173 = vand.u32 %v161, 2147483648
    %v174 = vor.u32 1.1754944e-38, %v173
    %v175 = vsel %vm172, %v174, %v170
    %v176 = vmul.f32 1.0, %v175
    %v177 = vld [vmem:[#allocation5] sm:$0xff]
    %v178 = vld [vmem:[#allocation5 + $0x8] sm:$0xff]
    %v179 = vld [vmem:[#allocation5 + $0x10] sm:$0xff]
    %v180 = vld [vmem:[#allocation5 + $0x18] sm:$0xff]
    %v181 = vld [vmem:[#allocation5 + $0x20] sm:$0xff]
    %v182 = vld [vmem:[#allocation5 + $0x28] sm:$0xff]
    %v183 = vld [vmem:[#allocation5 + $0x30] sm:$0xff]
    %v184 = vld [vmem:[#allocation5 + $0x38] sm:$0xff]
    %v185 = vld [vmem:[#allocation5 + $0x40] sm:$0xff]
    %v186 = vld [vmem:[#allocation5 + $0x48] sm:$0xff]
    %v187 = vld [vmem:[#allocation5 + $0x50] sm:$0xff]
    %v188 = vld [vmem:[#allocation5 + $0x58] sm:$0xff]
    %v189 = vld [vmem:[#allocation5 + $0x60] sm:$0xff]
    %v190 = vld [vmem:[#allocation5 + $0x68] sm:$0xff]
    %v191 = vld [vmem:[#allocation5 + $0x70] sm:$0xff]
    %v192 = vld [vmem:[#allocation5 + $0x78] sm:$0xff]
    %v193 = vld [vmem:[%s6] sm:$0x1]
    %v195 = vperm.slane %v193, 0
    %197 = vmatpush.msra.mxu0 %v192
    %198 = vmatpush.msra.mxu0 %v191
    %199 = vmatpush.msra.mxu0 %v190
    %200 = vmatpush.msra.mxu0 %v189
    %201 = vmatpush.msra.mxu0 %v188
    %202 = vmatpush.msra.mxu0 %v187
    %203 = vmatpush.msra.mxu0 %v186
    %204 = vmatpush.msra.mxu0 %v185
    %205 = vmatpush.msra.mxu0 %v184
    %206 = vmatpush.msra.mxu0 %v183
    %207 = vmatpush.msra.mxu0 %v182
    %208 = vmatpush.msra.mxu0 %v181
    %209 = vmatpush.msra.mxu0 %v180
    %210 = vmatpush.msra.mxu0 %v179
    %211 = vmatpush.msra.mxu0 %v178
    %212 = vmatpush.msra.mxu0 %v177
    %213 = vmatmul.f32.gmra.mxu0 %v176
    %v214 = vpop.f32.mrf.mxu0
    %v215 = vadd.f32 %v195, %v214
    %216 = vdwg.mxu0
    %v217 = vxor.u32 %v215, 2147483648
    %v218 = vmul.f32 %v217, 1.442695
    %v219 = vpow.pop %v218
    %v220 = vadd.f32 %v219, 1.0
    %v221 = vrcp.pop %v220
    %v222 = vmul.f32 %v220, %v221
    %v223 = vsub.f32 1.0, %v222
    %v224 = vmul.f32 %v221, %v223
    %v225 = vadd.f32 %v221, %v224
    %vm226 = vweird.f32 %v220
    %vm227 = vweird.f32 %v221
    %vm228 = vmor %vm226, %vm227
    %v229 = vsel %vm228, %v221, %v225
    %v230 = vand.u32 2147483647, %v220
    %vm231 = vcmp.eq.f32.partialorder %v230, 8.507059e+37
    %v232 = vand.u32 %v220, 2147483648
    %v233 = vor.u32 1.1754944e-38, %v232
    %v234 = vsel %vm231, %v233, %v229
    %v235 = vmul.f32 1.0, %v234
    %v236 = vld [vmem:[%s7] sm:$0xff]
    %v237 = vld [vmem:[%s7 + $0x8] sm:$0xff]
    %v238 = vld [vmem:[%s7 + $0x10] sm:$0xff]
    %v239 = vld [vmem:[%s7 + $0x18] sm:$0xff]
    %v240 = vld [vmem:[%s7 + $0x20] sm:$0xff]
    %v241 = vld [vmem:[%s7 + $0x28] sm:$0xff]
    %v242 = vld [vmem:[%s7 + $0x30] sm:$0xff]
    %v243 = vld [vmem:[%s7 + $0x38] sm:$0xff]
    %v244 = vld [vmem:[%s7 + $0x40] sm:$0xff]
    %v245 = vld [vmem:[%s7 + $0x48] sm:$0xff]
    %v246 = vld [vmem:[%s7 + $0x50] sm:$0xff]
    %v247 = vld [vmem:[%s7 + $0x58] sm:$0xff]
    %v248 = vld [vmem:[%s7 + $0x60] sm:$0xff]
    %v249 = vld [vmem:[%s7 + $0x68] sm:$0xff]
    %v250 = vld [vmem:[%s7 + $0x70] sm:$0xff]
    %v251 = vld [vmem:[%s7 + $0x78] sm:$0xff]
    %v252 = vld [vmem:[%s8] sm:$0x1]
    %v254 = vperm.slane %v252, 0
    %256 = vmatpush.msra.mxu0 %v251
    %257 = vmatpush.msra.mxu0 %v250
    %258 = vmatpush.msra.mxu0 %v249
    %259 = vmatpush.msra.mxu0 %v248
    %260 = vmatpush.msra.mxu0 %v247
    %261 = vmatpush.msra.mxu0 %v246
    %262 = vmatpush.msra.mxu0 %v245
    %263 = vmatpush.msra.mxu0 %v244
    %264 = vmatpush.msra.mxu0 %v243
    %265 = vmatpush.msra.mxu0 %v242
    %266 = vmatpush.msra.mxu0 %v241
    %267 = vmatpush.msra.mxu0 %v240
    %268 = vmatpush.msra.mxu0 %v239
    %269 = vmatpush.msra.mxu0 %v238
    %270 = vmatpush.msra.mxu0 %v237
    %271 = vmatpush.msra.mxu0 %v236
    %272 = vmatmul.f32.gmra.mxu0 %v235
    %v273 = vpop.f32.mrf.mxu0
    %v274 = vadd.f32 %v254, %v273
    %275 = vdwg.mxu0
    %276 = vst.msk [vmem:[#allocation7] sm:$0xff] %vm75, %v274
    %v277 = vrot.slane %v235, 4
    %v278 = vadd.f32 %v235, %v277
    %v279 = vrot.slane %v278, 2
    %v280 = vadd.f32 %v278, %v279
    %v281 = vrot.slane %v280, 1
    %v282 = vadd.f32 %v280, %v281
    %283 = vst [vmem:[#allocation8] sm:$0x1] %v282
    // Predicated region
    $region46: #{tpu_custom_call.1} parent=1 // pred_check
      _
    $region47: #{tpu_custom_call.1} parent=1 // pred_check_branch
      %285 = sbr.rel (0) target = $region49
    $region48: #{tpu_custom_call.1} parent=1 // pred_region
      %287 = vsyncadd [#allocation4], 0
      %s289 = sshll.u32 [#allocation7], 4
      %s290 = int_to_ptr.vmem [resolvable:$true] %s289
      %s291 = sshll.u32 %s9, 4
      %s292 = int_to_ptr.hbm [resolvable:$true] %s291
      %294 = dma.vmem_to_hbm [thread:$0]  %s290, 128, %s292, [#allocation4]
    $region49: #{tpu_custom_call.1} parent=1 // pred_fallthru
      _
    // Predicated region
    $region50: #{tpu_custom_call.1} parent=1 // pred_check
      _
    $region51: #{tpu_custom_call.1} parent=1 // pred_check_branch
      %296 = sbr.rel (0) target = $region53
    $region52: #{tpu_custom_call.1} parent=1 // pred_region
      %298 = vsyncadd [#allocation9], 0
      %s300 = sshll.u32 [#allocation8], 4
      %s301 = int_to_ptr.vmem [resolvable:$true] %s300
      %s302 = sshll.u32 %s10, 4
      %s303 = int_to_ptr.hbm [resolvable:$true] %s302
      %305 = dma.vmem_to_hbm [thread:$0]  %s301, 16, %s303, [#allocation9]
    $region53: #{tpu_custom_call.1} parent=1 // pred_fallthru
      _
    // Predicated region
    $region54: #{tpu_custom_call.1} parent=1 // pred_check
      _
    $region55: #{tpu_custom_call.1} parent=1 // pred_check_branch
      %307 = sbr.rel (0) target = $region57
    $region56: #{tpu_custom_call.1} parent=1 // pred_region
      %309 = dma.done [#allocation4], 128
    $region57: #{tpu_custom_call.1} parent=1 // pred_fallthru
      _
    // Predicated region
    $region58: #{tpu_custom_call.1} parent=1 // pred_check
      _
    $region59: #{tpu_custom_call.1} parent=1 // pred_check_branch
      %311 = sbr.rel (0) target = $region61
    $region60: #{tpu_custom_call.1} parent=1 // pred_region
      %313 = dma.done [#allocation9], 16
    $region61: #{tpu_custom_call.1} parent=1 // pred_fallthru
      _
    %314 = vsyncpa [#allocation3], 1
    %315 = vsyncpa [#allocation6], 1
    %316 = vsyncpa [#allocation4], 1
    %317 = vsyncpa [#allocation9], 1

// kernel: tpu_custom_call.1
$region0: #{tpu_custom_call.1}
  #allocation0 [shape = 'u32[]', space=smem, size = 0x4, offset = 0x4, fixed_abs, tag = 'smem constant byte address 0x4 - core index']
  #allocation1 [shape = 'u32[72,128]{1,0:T(1,128)}', space=vmem, size = 0x9000, scoped, tag = 'internal scratch']
  %s0 = inlined_call_operand.hbm [shape: f32[8,32], index: 0, kind: input, shape index: {}]
  %s1 = inlined_call_operand.vmem [shape: f32[32,128], index: 1, kind: input, shape index: {}]
  %s2 = inlined_call_operand.vmem [shape: f32[1,128], index: 2, kind: input, shape index: {}]
  %s3 = inlined_call_operand.vmem [shape: f32[128,128], index: 3, kind: input, shape index: {}]
  %s4 = inlined_call_operand.vmem [shape: f32[1,128], index: 4, kind: input, shape index: {}]
  %s5 = inlined_call_operand.hbm [shape: f32[128,128], index: 5, kind: input, shape index: {}]
  %s6 = inlined_call_operand.vmem [shape: f32[1,128], index: 6, kind: input, shape index: {}]
  %s7 = inlined_call_operand.vmem [shape: f32[128,32], index: 7, kind: input, shape index: {}]
  %s8 = inlined_call_operand.vmem [shape: f32[1,32], index: 8, kind: input, shape index: {}]
  %s9 = inlined_call_operand.hbm [shape: f32[8,32], index: 9, kind: output, shape index: {0}]
  %s10 = inlined_call_operand.hbm [shape: f32[1,1,128], index: 10, kind: output, shape index: {1}]
  %11 = xla_tuple %s9, %s10
  %s12 = sld [smem:[#allocation0]]
  $region62: #{tpu_custom_call.1} parent=0
    _
  %s14 = ssub.s32 1, %s12
  %s15 = scalar_select 0, %s14, %s12
  $region1: #{tpu_custom_call.1} parent=0
    #allocation2 [shape = 'u8[4096]{0}', space=vmem, size = 0x1000, scoped, tag = 'input window, operand 0, single buffered']
    #allocation3 [shape = 's32[1]{0}', space=sflag, size = 0x4, scoped, tag = 'scoped memory for tpu_custom_call.1']
    #allocation4 [shape = 's32[1]{0}', space=sflag, size = 0x4, scoped, tag = 'scoped memory for tpu_custom_call.1']
    #allocation5 [shape = 'u8[65536]{0}', space=vmem, size = 0x10000, scoped, tag = 'input window, operand 5, single buffered']
    #allocation6 [shape = 's32[1]{0}', space=sflag, size = 0x4, scoped, tag = 'scoped memory for tpu_custom_call.1']
    #allocation7 [shape = 'u8[4096]{0}', space=vmem, size = 0x1000, scoped, tag = 'output window, operand 0, single buffered']
    #allocation8 [shape = 'u8[512]{0}', space=vmem, size = 0x400, scoped, tag = 'output window, operand 1, single buffered']
    #allocation9 [shape = 's32[1]{0}', space=sflag, size = 0x4, scoped, tag = 'scoped memory for tpu_custom_call.1']
    %16 = vsyncpa [#allocation3], 0
    %17 = vsyncpa [#allocation6], 0
    %18 = vsyncpa [#allocation4], 0
    %19 = vsyncpa [#allocation9], 0
    // Predicated region
    $region2: #{tpu_custom_call.1} parent=1 // pred_check
      _
    $region3: #{tpu_custom_call.1} parent=1 // pred_check_branch
      %21 = sbr.rel (0) target = $region5
    $region4: #{tpu_custom_call.1} parent=1 // pred_region
      %23 = vsyncadd [#allocation3], 0
      %s25 = sshll.u32 %s0, 4
      %s26 = int_to_ptr.hbm [resolvable:$true] %s25
      %s27 = sshll.u32 [#allocation2], 4
      %s28 = int_to_ptr.vmem [resolvable:$true] %s27
      %30 = dma.hbm_to_vmem [thread:$0]  %s26, 128, %s28, [#allocation3]
    $region5: #{tpu_custom_call.1} parent=1 // pred_fallthru
      _
    // Predicated region
    $region6: #{tpu_custom_call.1} parent=1 // pred_check
      _
    $region7: #{tpu_custom_call.1} parent=1 // pred_check_branch
      %32 = sbr.rel (0) target = $region9
    $region8: #{tpu_custom_call.1} parent=1 // pred_region
      _
    $region9: #{tpu_custom_call.1} parent=1 // pred_fallthru
      _
    // Predicated region
    $region10: #{tpu_custom_call.1} parent=1 // pred_check
      _
    $region11: #{tpu_custom_call.1} parent=1 // pred_check_branch
      %34 = sbr.rel (0) target = $region13
    $region12: #{tpu_custom_call.1} parent=1 // pred_region
      _
    $region13: #{tpu_custom_call.1} parent=1 // pred_fallthru
      _
    // Predicated region
    $region14: #{tpu_custom_call.1} parent=1 // pred_check
      _
    $region15: #{tpu_custom_call.1} parent=1 // pred_check_branch
      %36 = sbr.rel (0) target = $region17
    $region16: #{tpu_custom_call.1} parent=1 // pred_region
      _
    $region17: #{tpu_custom_call.1} parent=1 // pred_fallthru
      _
    // Predicated region
    $region18: #{tpu_custom_call.1} parent=1 // pred_check
      _
    $region19: #{tpu_custom_call.1} parent=1 // pred_check_branch
      %38 = sbr.rel (0) target = $region21
    $region20: #{tpu_custom_call.1} parent=1 // pred_region
      _
    $region21: #{tpu_custom_call.1} parent=1 // pred_fallthru
      _
    // Predicated region
    $region22: #{tpu_custom_call.1} parent=1 // pred_check
      _
    $region23: #{tpu_custom_call.1} parent=1 // pred_check_branch
      %40 = sbr.rel (0) target = $region25
    $region24: #{tpu_custom_call.1} parent=1 // pred_region
      %42 = vsyncadd [#allocation6], 0
      %s43 = sshll.u32 %s5, 4
      %s44 = int_to_ptr.hbm [resolvable:$true] %s43
      %s45 = sshll.u32 [#allocation5], 4
      %s46 = int_to_ptr.vmem [resolvable:$true] %s45
      %51 = dma.hbm_to_vmem [thread:$0]  %s44, 2048, %s46, [#allocation6], 128, 128, 8
    $region25: #{tpu_custom_call.1} parent=1 // pred_fallthru
      _
    // Predicated region
    $region26: #{tpu_custom_call.1} parent=1 // pred_check
      _
    $region27: #{tpu_custom_call.1} parent=1 // pred_check_branch
      %53 = sbr.rel (0) target = $region29
    $region28: #{tpu_custom_call.1} parent=1 // pred_region
      _
    $region29: #{tpu_custom_call.1} parent=1 // pred_fallthru
      _
    // Predicated region
    $region30: #{tpu_custom_call.1} parent=1 // pred_check
      _
    $region31: #{tpu_custom_call.1} parent=1 // pred_check_branch
      %55 = sbr.rel (0) target = $region33
    $region32: #{tpu_custom_call.1} parent=1 // pred_region
      _
    $region33: #{tpu_custom_call.1} parent=1 // pred_fallthru
      _
    // Predicated region
    $region34: #{tpu_custom_call.1} parent=1 // pred_check
      _
    $region35: #{tpu_custom_call.1} parent=1 // pred_check_branch
      %57 = sbr.rel (0) target = $region37
    $region36: #{tpu_custom_call.1} parent=1 // pred_region
      _
    $region37: #{tpu_custom_call.1} parent=1 // pred_fallthru
      _
    // Predicated region
    $region38: #{tpu_custom_call.1} parent=1 // pred_check
      _
    $region39: #{tpu_custom_call.1} parent=1 // pred_check_branch
      %59 = sbr.rel (0) target = $region41
    $region40: #{tpu_custom_call.1} parent=1 // pred_region
      %61 = dma.done [#allocation3], 128
    $region41: #{tpu_custom_call.1} parent=1 // pred_fallthru
      _
    // Predicated region
    $region42: #{tpu_custom_call.1} parent=1 // pred_check
      _
    $region43: #{tpu_custom_call.1} parent=1 // pred_check_branch
      %63 = sbr.rel (0) target = $region45
    $region44: #{tpu_custom_call.1} parent=1 // pred_region
      %65 = dma.done [#allocation6], 2048
    $region45: #{tpu_custom_call.1} parent=1 // pred_fallthru
      _
    %v66 = vld [vmem:[#allocation2] sm:$0xff]
    %v67 = vld [vmem:[%s1] sm:$0xff]
    %v68 = vld [vmem:[%s1 + $0x8] sm:$0xff]
    %v69 = vld [vmem:[%s1 + $0x10] sm:$0xff]
    %v70 = vld [vmem:[%s1 + $0x18] sm:$0xff]
    %v71 = vld [vmem:[%s2] sm:$0x1]
    %v73 = vperm.slane %v71, 0
    %vm75 = vcmask 261120
    %v77 = vsel %vm75, %v66, 0
    %79 = vmatpush.msra.mxu0 0.0
    %80 = vmatpush.msra.mxu0 0.0
    %81 = vmatpush.msra.mxu0 0.0
    %82 = vmatpush.msra.mxu0 0.0
    %83 = vmatpush.msra.mxu0 0.0
    %84 = vmatpush.msra.mxu0 0.0
    %85 = vmatpush.msra.mxu0 0.0
    %86 = vmatpush.msra.mxu0 0.0
    %87 = vmatpush.msra.mxu0 0.0
    %88 = vmatpush.msra.mxu0 0.0
    %89 = vmatpush.msra.mxu0 0.0
    %90 = vmatpush.msra.mxu0 0.0
    %91 = vmatpush.msra.mxu0 %v70
    %92 = vmatpush.msra.mxu0 %v69
    %93 = vmatpush.msra.mxu0 %v68
    %94 = vmatpush.msra.mxu0 %v67
    %95 = vmatmul.f32.gmra.mxu0 %v77
    %v96 = vpop.f32.mrf.mxu0
    %v97 = vadd.f32 %v73, %v96
    %98 = vdwg.mxu0
    %v99 = vxor.u32 %v97, 2147483648
    %v100 = vmul.f32 %v99, 1.442695
    %v101 = vpow.pop %v100
    %v102 = vadd.f32 %v101, 1.0
    %v103 = vrcp.pop %v102
    %v104 = vmul.f32 %v102, %v103
    %v105 = vsub.f32 1.0, %v104
    %v106 = vmul.f32 %v103, %v105
    %v107 = vadd.f32 %v103, %v106
    %vm108 = vweird.f32 %v102
    %vm109 = vweird.f32 %v103
    %vm110 = vmor %vm108, %vm109
    %v111 = vsel %vm110, %v103, %v107
    %v112 = vand.u32 2147483647, %v102
    %vm113 = vcmp.eq.f32.partialorder %v112, 8.507059e+37
    %v114 = vand.u32 %v102, 2147483648
    %v115 = vor.u32 1.1754944e-38, %v114
    %v116 = vsel %vm113, %v115, %v111
    %v117 = vmul.f32 1.0, %v116
    %v118 = vld [vmem:[%s3] sm:$0xff]
    %v119 = vld [vmem:[%s3 + $0x8] sm:$0xff]
    %v120 = vld [vmem:[%s3 + $0x10] sm:$0xff]
    %v121 = vld [vmem:[%s3 + $0x18] sm:$0xff]
    %v122 = vld [vmem:[%s3 + $0x20] sm:$0xff]
    %v123 = vld [vmem:[%s3 + $0x28] sm:$0xff]
    %v124 = vld [vmem:[%s3 + $0x30] sm:$0xff]
    %v125 = vld [vmem:[%s3 + $0x38] sm:$0xff]
    %v126 = vld [vmem:[%s3 + $0x40] sm:$0xff]
    %v127 = vld [vmem:[%s3 + $0x48] sm:$0xff]
    %v128 = vld [vmem:[%s3 + $0x50] sm:$0xff]
    %v129 = vld [vmem:[%s3 + $0x58] sm:$0xff]
    %v130 = vld [vmem:[%s3 + $0x60] sm:$0xff]
    %v131 = vld [vmem:[%s3 + $0x68] sm:$0xff]
    %v132 = vld [vmem:[%s3 + $0x70] sm:$0xff]
    %v133 = vld [vmem:[%s3 + $0x78] sm:$0xff]
    %v134 = vld [vmem:[%s4] sm:$0x1]
    %v136 = vperm.slane %v134, 0
    %138 = vmatpush.msra.mxu0 %v133
    %139 = vmatpush.msra.mxu0 %v132
    %140 = vmatpush.msra.mxu0 %v131
    %141 = vmatpush.msra.mxu0 %v130
    %142 = vmatpush.msra.mxu0 %v129
    %143 = vmatpush.msra.mxu0 %v128
    %144 = vmatpush.msra.mxu0 %v127
    %145 = vmatpush.msra.mxu0 %v126
    %146 = vmatpush.msra.mxu0 %v125
    %147 = vmatpush.msra.mxu0 %v124
    %148 = vmatpush.msra.mxu0 %v123
    %149 = vmatpush.msra.mxu0 %v122
    %150 = vmatpush.msra.mxu0 %v121
    %151 = vmatpush.msra.mxu0 %v120
    %152 = vmatpush.msra.mxu0 %v119
    %153 = vmatpush.msra.mxu0 %v118
    %154 = vmatmul.f32.gmra.mxu0 %v117
    %v155 = vpop.f32.mrf.mxu0
    %v156 = vadd.f32 %v136, %v155
    %157 = vdwg.mxu0
    %v158 = vxor.u32 %v156, 2147483648
    %v159 = vmul.f32 %v158, 1.442695
    %v160 = vpow.pop %v159
    %v161 = vadd.f32 %v160, 1.0
    %v162 = vrcp.pop %v161
    %v163 = vmul.f32 %v161, %v162
    %v164 = vsub.f32 1.0, %v163
    %v165 = vmul.f32 %v162, %v164
    %v166 = vadd.f32 %v162, %v165
    %vm167 = vweird.f32 %v161
    %vm168 = vweird.f32 %v162
    %vm169 = vmor %vm167, %vm168
    %v170 = vsel %vm169, %v162, %v166
    %v171 = vand.u32 2147483647, %v161
    %vm172 = vcmp.eq.f32.partialorder %v171, 8.507059e+37
    %v173 = vand.u32 %v161, 2147483648
    %v174 = vor.u32 1.1754944e-38, %v173
    %v175 = vsel %vm172, %v174, %v170
    %v176 = vmul.f32 1.0, %v175
    %v177 = vld [vmem:[#allocation5] sm:$0xff]
    %v178 = vld [vmem:[#allocation5 + $0x8] sm:$0xff]
    %v179 = vld [vmem:[#allocation5 + $0x10] sm:$0xff]
    %v180 = vld [vmem:[#allocation5 + $0x18] sm:$0xff]
    %v181 = vld [vmem:[#allocation5 + $0x20] sm:$0xff]
    %v182 = vld [vmem:[#allocation5 + $0x28] sm:$0xff]
    %v183 = vld [vmem:[#allocation5 + $0x30] sm:$0xff]
    %v184 = vld [vmem:[#allocation5 + $0x38] sm:$0xff]
    %v185 = vld [vmem:[#allocation5 + $0x40] sm:$0xff]
    %v186 = vld [vmem:[#allocation5 + $0x48] sm:$0xff]
    %v187 = vld [vmem:[#allocation5 + $0x50] sm:$0xff]
    %v188 = vld [vmem:[#allocation5 + $0x58] sm:$0xff]
    %v189 = vld [vmem:[#allocation5 + $0x60] sm:$0xff]
    %v190 = vld [vmem:[#allocation5 + $0x68] sm:$0xff]
    %v191 = vld [vmem:[#allocation5 + $0x70] sm:$0xff]
    %v192 = vld [vmem:[#allocation5 + $0x78] sm:$0xff]
    %v193 = vld [vmem:[%s6] sm:$0x1]
    %v195 = vperm.slane %v193, 0
    %197 = vmatpush.msra.mxu0 %v192
    %198 = vmatpush.msra.mxu0 %v191
    %199 = vmatpush.msra.mxu0 %v190
    %200 = vmatpush.msra.mxu0 %v189
    %201 = vmatpush.msra.mxu0 %v188
    %202 = vmatpush.msra.mxu0 %v187
    %203 = vmatpush.msra.mxu0 %v186
    %204 = vmatpush.msra.mxu0 %v185
    %205 = vmatpush.msra.mxu0 %v184
    %206 = vmatpush.msra.mxu0 %v183
    %207 = vmatpush.msra.mxu0 %v182
    %208 = vmatpush.msra.mxu0 %v181
    %209 = vmatpush.msra.mxu0 %v180
    %210 = vmatpush.msra.mxu0 %v179
    %211 = vmatpush.msra.mxu0 %v178
    %212 = vmatpush.msra.mxu0 %v177
    %213 = vmatmul.f32.gmra.mxu0 %v176
    %v214 = vpop.f32.mrf.mxu0
    %v215 = vadd.f32 %v195, %v214
    %216 = vdwg.mxu0
    %v217 = vxor.u32 %v215, 2147483648
    %v218 = vmul.f32 %v217, 1.442695
    %v219 = vpow.pop %v218
    %v220 = vadd.f32 %v219, 1.0
    %v221 = vrcp.pop %v220
    %v222 = vmul.f32 %v220, %v221
    %v223 = vsub.f32 1.0, %v222
    %v224 = vmul.f32 %v221, %v223
    %v225 = vadd.f32 %v221, %v224
    %vm226 = vweird.f32 %v220
    %vm227 = vweird.f32 %v221
    %vm228 = vmor %vm226, %vm227
    %v229 = vsel %vm228, %v221, %v225
    %v230 = vand.u32 2147483647, %v220
    %vm231 = vcmp.eq.f32.partialorder %v230, 8.507059e+37
    %v232 = vand.u32 %v220, 2147483648
    %v233 = vor.u32 1.1754944e-38, %v232
    %v234 = vsel %vm231, %v233, %v229
    %v235 = vmul.f32 1.0, %v234
    %v236 = vld [vmem:[%s7] sm:$0xff]
    %v237 = vld [vmem:[%s7 + $0x8] sm:$0xff]
    %v238 = vld [vmem:[%s7 + $0x10] sm:$0xff]
    %v239 = vld [vmem:[%s7 + $0x18] sm:$0xff]
    %v240 = vld [vmem:[%s7 + $0x20] sm:$0xff]
    %v241 = vld [vmem:[%s7 + $0x28] sm:$0xff]
    %v242 = vld [vmem:[%s7 + $0x30] sm:$0xff]
    %v243 = vld [vmem:[%s7 + $0x38] sm:$0xff]
    %v244 = vld [vmem:[%s7 + $0x40] sm:$0xff]
    %v245 = vld [vmem:[%s7 + $0x48] sm:$0xff]
    %v246 = vld [vmem:[%s7 + $0x50] sm:$0xff]
    %v247 = vld [vmem:[%s7 + $0x58] sm:$0xff]
    %v248 = vld [vmem:[%s7 + $0x60] sm:$0xff]
    %v249 = vld [vmem:[%s7 + $0x68] sm:$0xff]
    %v250 = vld [vmem:[%s7 + $0x70] sm:$0xff]
    %v251 = vld [vmem:[%s7 + $0x78] sm:$0xff]
    %v252 = vld [vmem:[%s8] sm:$0x1]
    %v254 = vperm.slane %v252, 0
    %256 = vmatpush.msra.mxu0 %v251
    %257 = vmatpush.msra.mxu0 %v250
    %258 = vmatpush.msra.mxu0 %v249
    %259 = vmatpush.msra.mxu0 %v248
    %260 = vmatpush.msra.mxu0 %v247
    %261 = vmatpush.msra.mxu0 %v246
    %262 = vmatpush.msra.mxu0 %v245
    %263 = vmatpush.msra.mxu0 %v244
    %264 = vmatpush.msra.mxu0 %v243
    %265 = vmatpush.msra.mxu0 %v242
    %266 = vmatpush.msra.mxu0 %v241
    %267 = vmatpush.msra.mxu0 %v240
    %268 = vmatpush.msra.mxu0 %v239
    %269 = vmatpush.msra.mxu0 %v238
    %270 = vmatpush.msra.mxu0 %v237
    %271 = vmatpush.msra.mxu0 %v236
    %272 = vmatmul.f32.gmra.mxu0 %v235
    %v273 = vpop.f32.mrf.mxu0
    %v274 = vadd.f32 %v254, %v273
    %275 = vdwg.mxu0
    %276 = vst.msk [vmem:[#allocation7] sm:$0xff] %vm75, %v274
    %v277 = vrot.slane %v235, 4
    %v278 = vadd.f32 %v235, %v277
    %v279 = vrot.slane %v278, 2
    %v280 = vadd.f32 %v278, %v279
    %v281 = vrot.slane %v280, 1
    %v282 = vadd.f32 %v280, %v281
    %283 = vst [vmem:[#allocation8] sm:$0x1] %v282
    // Predicated region
    $region46: #{tpu_custom_call.1} parent=1 // pred_check
      _
    $region47: #{tpu_custom_call.1} parent=1 // pred_check_branch
      %285 = sbr.rel (0) target = $region49
    $region48: #{tpu_custom_call.1} parent=1 // pred_region
      %287 = vsyncadd [#allocation4], 0
      %s289 = sshll.u32 [#allocation7], 4
      %s290 = int_to_ptr.vmem [resolvable:$true] %s289
      %s291 = sshll.u32 %s9, 4
      %s292 = int_to_ptr.hbm [resolvable:$true] %s291
      %294 = dma.vmem_to_hbm [thread:$0]  %s290, 128, %s292, [#allocation4]
    $region49: #{tpu_custom_call.1} parent=1 // pred_fallthru
      _
    // Predicated region
    $region50: #{tpu_custom_call.1} parent=1 // pred_check
      _
    $region51: #{tpu_custom_call.1} parent=1 // pred_check_branch
      %296 = sbr.rel (0) target = $region53
    $region52: #{tpu_custom_call.1} parent=1 // pred_region
      %298 = vsyncadd [#allocation9], 0
      %s300 = sshll.u32 [#allocation8], 4
      %s301 = int_to_ptr.vmem [resolvable:$true] %s300
      %s302 = sshll.u32 %s10, 4
      %s303 = int_to_ptr.hbm [resolvable:$true] %s302
      %305 = dma.vmem_to_hbm [thread:$0]  %s301, 16, %s303, [#allocation9]
    $region53: #{tpu_custom_call.1} parent=1 // pred_fallthru
      _
    // Predicated region
    $region54: #{tpu_custom_call.1} parent=1 // pred_check
      _
    $region55: #{tpu_custom_call.1} parent=1 // pred_check_branch
      %307 = sbr.rel (0) target = $region57
    $region56: #{tpu_custom_call.1} parent=1 // pred_region
      %309 = dma.done [#allocation4], 128
    $region57: #{tpu_custom_call.1} parent=1 // pred_fallthru
      _
    // Predicated region
    $region58: #{tpu_custom_call.1} parent=1 // pred_check
      _
    $region59: #{tpu_custom_call.1} parent=1 // pred_check_branch
      %311 = sbr.rel (0) target = $region61
    $region60: #{tpu_custom_call.1} parent=1 // pred_region
      %313 = dma.done [#allocation9], 16
    $region61: #{tpu_custom_call.1} parent=1 // pred_fallthru
      _
    %314 = vsyncpa [#allocation3], 1
    %315 = vsyncpa [#allocation6], 1
    %316 = vsyncpa [#allocation4], 1
    %317 = vsyncpa [#allocation9], 1

</llo_original>
